<compile_context>
chip_gen: v6e
topology: v6e:2x2x1
jax: 0.10.0
libtpu: 0.0.40
codegen_flags: <defaults>
</compile_context>

<pallas_src>
import functools
import math

import jax
import jax.numpy as jnp
from jax.experimental import pallas as pl
from jax.experimental.pallas import tpu as pltpu

_INV_SQRT2 = 1.0 / math.sqrt(2.0)


def _round_up(x, m):
    return ((x + m - 1) // m) * m


def _cdiv(a, b):
    return (a + b - 1) // b


@functools.lru_cache(maxsize=1)
def _vmem_capacity_bytes():
    """Physical VMEM per TensorCore (128 MiB on v5e/v6e, 64 MiB on v7x)."""
    try:
        return int(pltpu.get_tpu_info().vmem_capacity_bytes)
    except Exception:
        return 128 << 20


# ---------------------------------------------------------------------------
# Kernels. Grid = (M tiles, hidden tiles). The hidden axis is the reduction
# ("arbitrary"); the output block index is constant along it, so the output
# tile stays resident in VMEM across hidden steps.
# ---------------------------------------------------------------------------


def _mlp_kernel_f32(x_ref, w1_ref, b1_ref, w2_ref, b2_ref, o_ref):
    """f32 output: accumulate directly into the resident output block."""
    h_idx = pl.program_id(1)

    h = jnp.dot(x_ref[...], w1_ref[...], preferred_element_type=jnp.float32)
    h = h + b1_ref[...].astype(jnp.float32)
    # Exact erf GELU (torch.nn.GELU default), kept in f32 (safe on v5e too).
    # TODO(synk): optionally switch to the tanh/exp GELU (EUP slot) for
    # very small C_in on v5e where the VALU becomes the saturated unit.
    h = 0.5 * h * (1.0 + jax.lax.erf(h * _INV_SQRT2))
    # drop1 / drop2: p = 0.0 -> identity.
    part = jnp.dot(h.astype(w2_ref.dtype), w2_ref[...],
                   preferred_element_type=jnp.float32)

    @pl.when(h_idx == 0)
    def _():
        o_ref[...] = part + b2_ref[...].astype(jnp.float32)

    @pl.when(h_idx != 0)
    def _():
        o_ref[...] += part


def _mlp_kernel_acc(x_ref, w1_ref, b1_ref, w2_ref, b2_ref, o_ref, acc_ref):
    """Low-precision output: f32 VMEM accumulator, single cast at the end."""
    h_idx = pl.program_id(1)

    h = jnp.dot(x_ref[...], w1_ref[...], preferred_element_type=jnp.float32)
    h = h + b1_ref[...].astype(jnp.float32)
    h = 0.5 * h * (1.0 + jax.lax.erf(h * _INV_SQRT2))
    part = jnp.dot(h.astype(w2_ref.dtype), w2_ref[...],
                   preferred_element_type=jnp.float32)

    @pl.when(h_idx == 0)
    def _():
        acc_ref[...] = part          # init with first partial (no zero-fill)

    @pl.when(h_idx != 0)
    def _():
        acc_ref[...] += part

    @pl.when(h_idx == pl.num_programs(1) - 1)
    def _():
        o_ref[...] = (acc_ref[...] + b2_ref[...].astype(jnp.float32)
                      ).astype(o_ref.dtype)


# ---------------------------------------------------------------------------
# Tile selection.
# ---------------------------------------------------------------------------


def _choose_tiles(M_pad, C_in_pad, H_pad, C_out_pad, x_bytes, w_bytes,
                  use_acc, vmem_budget, force_two_m_tiles):
    """Pick (tm, th). Largest M tile that fits the budget; keep all weights
    resident in VMEM (th == H_pad) when they fit in ~half of it."""

    def footprint(tm, th):
        b = (2 * tm * C_in_pad * x_bytes          # x tile (double-buffered)
             + 2 * C_in_pad * th * w_bytes        # w1 tile
             + 2 * 8 * th * w_bytes               # b1 tile (sublane-padded)
             + 2 * th * C_out_pad * w_bytes       # w2 tile
             + 2 * 8 * C_out_pad * w_bytes        # b2 tile
             + 2 * tm * C_out_pad * x_bytes)      # output tile
        if use_acc:
            b += tm * C_out_pad * 4               # f32 accumulator scratch
        return b

    def even_tm(tm_cand):
        # Split M into equal-ish tiles so the last tile is not mostly padding.
        n = _cdiv(M_pad, tm_cand)
        return _round_up(_cdiv(M_pad, n), 8)

    tm_candidates = [1024, 768, 512, 384, 256, 192, 128, 64, 32, 16, 8]
    th_candidates = [512, 256, 128]

    weight_bytes = 2 * (C_in_pad * H_pad + 8 * H_pad
                        + H_pad * C_out_pad + 8 * C_out_pad) * w_bytes
    weights_resident = weight_bytes <= vmem_budget // 2

    tm_eff, th_eff = 8, min(128, H_pad)
    found = False
    if weights_resident:
        for tm in tm_candidates:
            tm_c = even_tm(tm)
            if footprint(tm_c, H_pad) <= vmem_budget:
                tm_eff, th_eff = tm_c, H_pad
                found = True
                break
    if not found:
        for tm in tm_candidates:
            tm_c = even_tm(tm)
            for th in th_candidates:
                th_c = min(th, H_pad)
                if footprint(tm_c, th_c) <= vmem_budget:
                    tm_eff, th_eff = tm_c, th_c
                    found = True
                    break
            if found:
                break

    # Feed both v7x TensorCores with the 'parallel' M axis. This is free when
    # weights are resident (no extra weight traffic); otherwise only do it on
    # chips that look like v7x (64 MiB VMEM per TC).
    if (weights_resident or force_two_m_tiles) and M_pad >= 16:
        tm_eff = min(tm_eff, _round_up(_cdiv(M_pad, 2), 8))

    return tm_eff, th_eff, footprint(tm_eff, th_eff)


# ---------------------------------------------------------------------------
# Public wrapper.
# ---------------------------------------------------------------------------


@functools.partial(jax.jit, static_argnames=("tm", "th"))
def mlp_pallas(x, w1, b1, w2, b2, *, tm=None, th=None):
    """x: (B, N, C_in) -> (B, N, C_out).  fc1 -> GELU -> fc2 (dropout p=0)."""
    B, N, C_in = x.shape
    C_in_w, H = w1.shape
    H_w, C_out = w2.shape
    assert C_in == C_in_w and H == H_w
    assert b1.shape == (H,) and b2.shape == (C_out,)

    M = B * N
    x_bytes = jnp.dtype(x.dtype).itemsize
    w_bytes = jnp.dtype(w1.dtype).itemsize
    use_acc = jnp.dtype(x.dtype) != jnp.dtype(jnp.float32)

    # Per-generation VMEM budget, leaving headroom for compiler scratch.
    vmem_cap = _vmem_capacity_bytes()
    vmem_budget = int(vmem_cap * 0.85)
    likely_two_cores = vmem_cap <= (64 << 20)  # v7x: 64 MiB / TC, 2 TCs/chip

    M_pad = _round_up(M, 8)
    C_in_pad = _round_up(C_in, 128)
    C_out_pad = _round_up(C_out, 128)
    H_pad = _round_up(H, 128)

    tm_eff, th_eff, footprint = _choose_tiles(
        M_pad, C_in_pad, H_pad, C_out_pad, x_bytes, w_bytes,
        use_acc, vmem_budget, likely_two_cores)
    if tm is not None:                       # optional manual sweep overrides
        tm_eff = min(_round_up(tm, 8), M_pad)
    if th is not None:
        th_eff = min(_round_up(th, 128), H_pad)

    M_grid = _round_up(M_pad, tm_eff)
    H_grid = _round_up(H_pad, th_eff)

    # Zero padding is numerically exact (GELU(0)=0, padded weight/bias entries
    # are 0). Padding is skipped when dims are already aligned, so typical
    # transformer shapes incur no extra HBM copies of x / w1 / w2.
    def pad2(a, rows, cols):
        if a.shape == (rows, cols):
            return a
        return jnp.pad(a, ((0, rows - a.shape[0]), (0, cols - a.shape[1])))

    x2 = pad2(x.reshape(M, C_in), M_grid, C_in_pad)
    w1p = pad2(w1, C_in_pad, H_grid)
    b1p = pad2(b1.reshape(1, H), 1, H_grid)
    w2p = pad2(w2, H_grid, C_out_pad)
    b2p = pad2(b2.reshape(1, C_out), 1, C_out_pad)

    grid = (M_grid // tm_eff, H_grid // th_eff)

    vmem_limit = int(min(max(footprint * 1.2 + (2 << 20), 16 << 20),
                         vmem_cap * 0.9))

    if use_acc:
        kernel = _mlp_kernel_acc
        scratch_shapes = [pltpu.VMEM((tm_eff, C_out_pad), jnp.float32)]
    else:
        kernel = _mlp_kernel_f32
        scratch_shapes = []

    out2 = pl.pallas_call(
        kernel,
        out_shape=jax.ShapeDtypeStruct((M_grid, C_out_pad), x.dtype),
        grid_spec=pltpu.PrefetchScalarGridSpec(
            num_scalar_prefetch=0,
            grid=grid,
            in_specs=[
                pl.BlockSpec((tm_eff, C_in_pad), lambda i, h: (i, 0)),
                pl.BlockSpec((C_in_pad, th_eff), lambda i, h: (0, h)),
                pl.BlockSpec((1, th_eff), lambda i, h: (0, h)),
                pl.BlockSpec((th_eff, C_out_pad), lambda i, h: (h, 0)),
                pl.BlockSpec((1, C_out_pad), lambda i, h: (0, 0)),
            ],
            out_specs=pl.BlockSpec((tm_eff, C_out_pad), lambda i, h: (i, 0)),
            scratch_shapes=scratch_shapes,
        ),
        compiler_params=pltpu.CompilerParams(
            dimension_semantics=("parallel", "arbitrary"),
            vmem_limit_bytes=vmem_limit,
        ),
    )(x2, w1p, b1p, w2p, b2p)

    return out2[:M, :C_out].reshape(B, N, C_out)


def mlp_reference(x, w1, b1, w2, b2):
    h = jnp.einsum("bnc,ch->bnh", x, w1) + b1
    h = 0.5 * h * (1.0 + jax.lax.erf(h * _INV_SQRT2))
    return jnp.einsum("bnh,ho->bno", h, w2) + b2


if __name__ == "__main__":
    key = jax.random.PRNGKey(0)
    B, N = 2, 8            # tokens M = 16
    in_features = 32
    hidden_features = 64
    out_features = 32

    k_x, k_w1, k_b1, k_w2, k_b2 = jax.random.split(key, 5)
    x = jax.random.normal(k_x, (B, N, in_features), dtype=jnp.float32)

    # nn.Linear-style init (uniform in +-1/sqrt(fan_in))
    lim1 = 1.0 / math.sqrt(in_features)
    w1 = jax.random.uniform(k_w1, (in_features, hidden_features),
                            minval=-lim1, maxval=lim1, dtype=jnp.float32)
    b1 = jax.random.uniform(k_b1, (hidden_features,),
                            minval=-lim1, maxval=lim1, dtype=jnp.float32)
    lim2 = 1.0 / math.sqrt(hidden_features)
    w2 = jax.random.uniform(k_w2, (hidden_features, out_features),
                            minval=-lim2, maxval=lim2, dtype=jnp.float32)
    b2 = jax.random.uniform(k_b2, (out_features,),
                            minval=-lim2, maxval=lim2, dtype=jnp.float32)

    # f32 path: exact check against reference.
    out = jax.block_until_ready(mlp_pallas(x, w1, b1, w2, b2))
    ref = mlp_reference(x, w1, b1, w2, b2)
    assert out.shape == (B, N, out_features)
    assert jnp.allclose(out, ref, atol=1e-5, rtol=1e-5), "f32 mismatch vs reference"

    # bf16 path (recommended on v5e/v6e/v7x): bf16 MXU with f32 accumulation.
    bf = jnp.bfloat16
    out_bf16 = jax.block_until_ready(
        mlp_pallas(x.astype(bf), w1.astype(bf), b1.astype(bf),
                   w2.astype(bf), b2.astype(bf)))
    assert out_bf16.shape == (B, N, out_features)
    assert jnp.allclose(out_bf16.astype(jnp.float32), ref, atol=1e-1, rtol=1e-1), \
        "bf16 mismatch vs reference"

    print("KERNEL_OK")
</pallas_src>

<mosaic_0001>
module attributes {stable_mosaic.version = 11 : i64} {
  func.func @_mlp_kernel_f32(%arg0: i32, %arg1: i32, %arg2: memref<8x128xf32, #tpu.memory_space<vmem>>, %arg3: memref<128x128xf32, #tpu.memory_space<vmem>>, %arg4: memref<1x128xf32, #tpu.memory_space<vmem>>, %arg5: memref<128x128xf32, #tpu.memory_space<vmem>>, %arg6: memref<1x128xf32, #tpu.memory_space<vmem>>, %arg7: memref<8x128xf32, #tpu.memory_space<vmem>>) attributes {dimension_semantics = [#tpu.dimension_semantics<parallel>, #tpu.dimension_semantics<arbitrary>], iteration_bounds = array<i64: 2, 1>, scalar_prefetch = 0 : i64, scratch_operands = 0 : i64, tpu.core_type = #tpu.core_type<tc>, window_params = [{transform_indices = @transform_0, window_bounds = array<i64: 8, 128>}, {transform_indices = @transform_1, window_bounds = array<i64: 128, 128>}, {transform_indices = @transform_2, window_bounds = array<i64: 1, 128>}, {transform_indices = @transform_3, window_bounds = array<i64: 128, 128>}, {pipeline_mode = #tpu.pipeline_mode<synchronous>, transform_indices = @transform_4, window_bounds = array<i64: 1, 128>}, {transform_indices = @transform_5, window_bounds = array<i64: 8, 128>}]} {
    %c0 = arith.constant 0 : index
    %c0_0 = arith.constant 0 : index
    %0 = vector.load %arg2[%c0, %c0_0] : memref<8x128xf32, #tpu.memory_space<vmem>>, vector<8x128xf32>
    %c0_1 = arith.constant 0 : index
    %c0_2 = arith.constant 0 : index
    %1 = vector.load %arg3[%c0_1, %c0_2] : memref<128x128xf32, #tpu.memory_space<vmem>>, vector<128x128xf32>
    %cst = arith.constant dense<0.000000e+00> : vector<8x128xf32>
    %2 = tpu.matmul %0, %1, %cst {dimension_numbers = #tpu.dot_dimension_numbers<[1], [0], [0], [1], [0, 0, 1, 1], [], []>} : vector<8x128xf32>, vector<128x128xf32>, vector<8x128xf32> -> vector<8x128xf32>
    %c0_3 = arith.constant 0 : index
    %c0_4 = arith.constant 0 : index
    %3 = vector.load %arg4[%c0_3, %c0_4] : memref<1x128xf32, #tpu.memory_space<vmem>>, vector<1x128xf32>
    %4 = vector.broadcast %3 : vector<1x128xf32> to vector<8x128xf32>
    %5 = arith.addf %2, %4 : vector<8x128xf32>
    %cst_5 = arith.constant 5.000000e-01 : f32
    %6 = vector.broadcast %cst_5 : f32 to vector<8x128xf32>
    %7 = arith.mulf %6, %5 : vector<8x128xf32>
    %cst_6 = arith.constant 0.707106769 : f32
    %8 = vector.broadcast %cst_6 : f32 to vector<8x128xf32>
    %9 = arith.mulf %5, %8 : vector<8x128xf32>
    %10 = math.erf %9 : vector<8x128xf32>
    %cst_7 = arith.constant 1.000000e+00 : f32
    %11 = vector.broadcast %cst_7 : f32 to vector<8x128xf32>
    %12 = arith.addf %11, %10 : vector<8x128xf32>
    %13 = arith.mulf %7, %12 : vector<8x128xf32>
    %c0_8 = arith.constant 0 : index
    %c0_9 = arith.constant 0 : index
    %14 = vector.load %arg5[%c0_8, %c0_9] : memref<128x128xf32, #tpu.memory_space<vmem>>, vector<128x128xf32>
    %cst_10 = arith.constant dense<0.000000e+00> : vector<8x128xf32>
    %15 = tpu.matmul %13, %14, %cst_10 {dimension_numbers = #tpu.dot_dimension_numbers<[1], [0], [0], [1], [0, 0, 1, 1], [], []>} : vector<8x128xf32>, vector<128x128xf32>, vector<8x128xf32> -> vector<8x128xf32>
    %c0_i32 = arith.constant 0 : i32
    %16 = arith.cmpi eq, %arg1, %c0_i32 : i32
    %17 = arith.extui %16 : i1 to i32
    %c0_i32_11 = arith.constant 0 : i32
    %18 = arith.cmpi ne, %17, %c0_i32_11 : i32
    scf.if %18 {
      %c0_14 = arith.constant 0 : index
      %c0_15 = arith.constant 0 : index
      %22 = vector.load %arg6[%c0_14, %c0_15] : memref<1x128xf32, #tpu.memory_space<vmem>>, vector<1x128xf32>
      %23 = vector.broadcast %22 : vector<1x128xf32> to vector<8x128xf32>
      %24 = arith.addf %15, %23 : vector<8x128xf32>
      %c0_16 = arith.constant 0 : index
      %c0_17 = arith.constant 0 : index
      %25 = vector.load %arg7[%c0_16, %c0_17] : memref<8x128xf32, #tpu.memory_space<vmem>>, vector<8x128xf32>
      tpu.vector_store %arg7[%c0_16, %c0_17], %24 {strides = array<i32>} : memref<8x128xf32, #tpu.memory_space<vmem>>, vector<8x128xf32>,
    } else {
    }
    %c0_i32_12 = arith.constant 0 : i32
    %19 = arith.cmpi ne, %arg1, %c0_i32_12 : i32
    %20 = arith.extui %19 : i1 to i32
    %c0_i32_13 = arith.constant 0 : i32
    %21 = arith.cmpi ne, %20, %c0_i32_13 : i32
    scf.if %21 {
      %c0_14 = arith.constant 0 : index
      %c0_15 = arith.constant 0 : index
      %22 = vector.load %arg7[%c0_14, %c0_15] : memref<8x128xf32, #tpu.memory_space<vmem>>, vector<8x128xf32>
      %23 = arith.addf %22, %15 : vector<8x128xf32>
      %c0_16 = arith.constant 0 : index
      %c0_17 = arith.constant 0 : index
      %24 = vector.load %arg7[%c0_16, %c0_17] : memref<8x128xf32, #tpu.memory_space<vmem>>, vector<8x128xf32>
      tpu.vector_store %arg7[%c0_16, %c0_17], %23 {strides = array<i32>} : memref<8x128xf32, #tpu.memory_space<vmem>>, vector<8x128xf32>,
    } else {
    }
    return
  }
  func.func @transform_0(%arg0: i32, %arg1: i32) -> (i32, i32) {
    %c0_i32 = arith.constant 0 : i32
    %c0_i32_0 = arith.constant 0 : i32
    return %arg0, %c0_i32 : i32, i32
  }
  func.func @transform_1(%arg0: i32, %arg1: i32) -> (i32, i32) {
    %c0_i32 = arith.constant 0 : i32
    %c0_i32_0 = arith.constant 0 : i32
    return %c0_i32, %arg1 : i32, i32
  }
  func.func @transform_2(%arg0: i32, %arg1: i32) -> (i32, i32) {
    %c0_i32 = arith.constant 0 : i32
    %c0_i32_0 = arith.constant 0 : i32
    return %c0_i32, %arg1 : i32, i32
  }
  func.func @transform_3(%arg0: i32, %arg1: i32) -> (i32, i32) {
    %c0_i32 = arith.constant 0 : i32
    %c0_i32_0 = arith.constant 0 : i32
    return %arg1, %c0_i32 : i32, i32
  }
  func.func @transform_4(%arg0: i32, %arg1: i32) -> (i32, i32) {
    %c0_i32 = arith.constant 0 : i32
    %c0_i32_0 = arith.constant 0 : i32
    %c0_i32_1 = arith.constant 0 : i32
    return %c0_i32, %c0_i32_0 : i32, i32
  }
  func.func @transform_5(%arg0: i32, %arg1: i32) -> (i32, i32) {
    %c0_i32 = arith.constant 0 : i32
    %c0_i32_0 = arith.constant 0 : i32
    return %arg0, %c0_i32 : i32, i32
  }
}

</mosaic_0001>

<llo_original>
// kernel: mlp_pallas.1
$region0: #{mlp_pallas.1}
  #allocation0 [shape = 'u32[]', space=smem, size = 0x4, offset = 0x4, fixed_abs, tag = 'smem constant byte address 0x4 - core index']
  #allocation1 [shape = 'u32[144,128]{1,0:T(1,128)}', space=vmem, size = 0x12000, scoped, tag = 'internal scratch']
  %s0 = inlined_call_operand.vmem [shape: f32[16,128], index: 0, kind: input, shape index: {}]
  %s1 = inlined_call_operand.vmem [shape: f32[128,128], index: 1, kind: input, shape index: {}]
  %s2 = inlined_call_operand.vmem [shape: f32[1,128], index: 2, kind: input, shape index: {}]
  %s3 = inlined_call_operand.vmem [shape: f32[128,128], index: 3, kind: input, shape index: {}]
  %s4 = inlined_call_operand.vmem [shape: f32[1,128], index: 4, kind: input, shape index: {}]
  %s5 = inlined_call_operand.vmem [shape: f32[16,128], index: 5, kind: output, shape index: {}]
  %s6 = sld [smem:[#allocation0]]
  $region61: #{mlp_pallas.1} parent=0
    _
  %s8 = ssub.s32 1, %s6
  %s9 = scalar_select 0, %s8, %s6
  loop: start=0, step=1, limit=4
  $region2: #{mlp_pallas.1} parent=0 // loop_pre_header
    _
  $region3: #{mlp_pallas.1} parent=0 // loop_header
    %s11 = sphi 0, %s15
    %p12 = scmp.ge.s32.totalorder %s11, 4
    %s18 = sphi 0, %s30
    %s19 = sphi 0, %s26
    %s20 = sphi 0, %s18
    %s21 = sphi 0, %s19
    %s22 = sphi 0, %s20
    %s23 = sphi 0, %s21
    %s33 = sphi 0, %s35
    %s36 = sphi 0, %s33
    %s37 = sphi 0, %s36
    %s53 = sphi 0, %s37
    %s59 = sphi 0, %s61
    %s62 = sphi 0, %s59
    %s63 = sphi 0, %s62
    %s79 = sphi 0, %s63
    %s85 = sphi 0, %s87
    %s88 = sphi 0, %s85
    %s89 = sphi 0, %s88
    %s105 = sphi 0, %s89
    %s111 = sphi 0, %s113
    %s114 = sphi 0, %s111
    %s115 = sphi 0, %s114
    %s131 = sphi 0, %s115
    %s135 = sphi 0, %s135
    %s137 = sphi 0, %s135
    %s138 = sphi 0, %s137
    %s152 = sphi 0, %s138
    %s158 = sphi 0, %s160
    %s161 = sphi 0, %s158
    %s162 = sphi 0, %s161
    %s178 = sphi 0, %s162
  $region4: #{mlp_pallas.1} parent=0 // loop_header_branch
    %14 = sbr.rel (%p12) target = $region8
  $region5: #{mlp_pallas.1} parent=0 // loop_body
    %s16 = ssub.s32 %s11, 1
    %s17 = ssub.s32 %s11, 2
    %s24 = sadd.s32 1, %s19
    %p25 = scmp.ge.s32.totalorder %s24, 1
    %s26 = scalar_select %p25, 0, %s24
    %s27 = sadd.s32 1, %s18
    %s28 = scalar_select %p25, %s27, %s18
    %p29 = scmp.ge.s32.totalorder %s28, 2
    %s30 = scalar_select %p29, 0, %s28
    %s31 = ssub.s32 %s18, %s30
    %p32 = scmp.eq.s32.totalorder %s31, 0
    %s34 = sadd.s32 %s33, 1
    %s35 = scalar_select %p32, %s33, %s34
    %p38 = pneg %p32
    %p39 = scmp.eq.s32.totalorder %s11, 1
    %p40 = por %p38, %p39
    %p41 = scmp.ne.s32.totalorder %s33, %s36
    %p42 = scmp.eq.s32.totalorder %s11, 0
    %p43 = por %p41, %p42
    %p44 = scmp.ne.s32.totalorder %s33, %s36
    %p45 = scmp.eq.s32.totalorder %s16, 1
    %p46 = por %p44, %p45
    %p47 = scmp.ne.s32.totalorder %s36, %s37
    %p48 = scmp.eq.s32.totalorder %s16, 0
    %p49 = por %p47, %p48
    %p50 = scmp.ne.s32.totalorder %s36, %s37
    %p51 = scmp.eq.s32.totalorder %s17, 1
    %p52 = por %p50, %p51
    %p54 = scmp.ne.s32.totalorder %s37, %s53
    %p55 = scmp.eq.s32.totalorder %s17, 0
    %p56 = por %p54, %p55
    %s57 = ssub.s32 %s19, %s26
    %p58 = scmp.eq.s32.totalorder %s57, 0
    %s60 = sadd.s32 %s59, 1
    %s61 = scalar_select %p58, %s59, %s60
    %p64 = pneg %p58
    %p65 = scmp.eq.s32.totalorder %s11, 1
    %p66 = por %p64, %p65
    %p67 = scmp.ne.s32.totalorder %s59, %s62
    %p68 = scmp.eq.s32.totalorder %s11, 0
    %p69 = por %p67, %p68
    %p70 = scmp.ne.s32.totalorder %s59, %s62
    %p71 = scmp.eq.s32.totalorder %s16, 1
    %p72 = por %p70, %p71
    %p73 = scmp.ne.s32.totalorder %s62, %s63
    %p74 = scmp.eq.s32.totalorder %s16, 0
    %p75 = por %p73, %p74
    %p76 = scmp.ne.s32.totalorder %s62, %s63
    %p77 = scmp.eq.s32.totalorder %s17, 1
    %p78 = por %p76, %p77
    %p80 = scmp.ne.s32.totalorder %s63, %s79
    %p81 = scmp.eq.s32.totalorder %s17, 0
    %p82 = por %p80, %p81
    %s83 = ssub.s32 %s19, %s26
    %p84 = scmp.eq.s32.totalorder %s83, 0
    %s86 = sadd.s32 %s85, 1
    %s87 = scalar_select %p84, %s85, %s86
    %p90 = pneg %p84
    %p91 = scmp.eq.s32.totalorder %s11, 1
    %p92 = por %p90, %p91
    %p93 = scmp.ne.s32.totalorder %s85, %s88
    %p94 = scmp.eq.s32.totalorder %s11, 0
    %p95 = por %p93, %p94
    %p96 = scmp.ne.s32.totalorder %s85, %s88
    %p97 = scmp.eq.s32.totalorder %s16, 1
    %p98 = por %p96, %p97
    %p99 = scmp.ne.s32.totalorder %s88, %s89
    %p100 = scmp.eq.s32.totalorder %s16, 0
    %p101 = por %p99, %p100
    %p102 = scmp.ne.s32.totalorder %s88, %s89
    %p103 = scmp.eq.s32.totalorder %s17, 1
    %p104 = por %p102, %p103
    %p106 = scmp.ne.s32.totalorder %s89, %s105
    %p107 = scmp.eq.s32.totalorder %s17, 0
    %p108 = por %p106, %p107
    %s109 = ssub.s32 %s19, %s26
    %p110 = scmp.eq.s32.totalorder %s109, 0
    %s112 = sadd.s32 %s111, 1
    %s113 = scalar_select %p110, %s111, %s112
    %p116 = pneg %p110
    %p117 = scmp.eq.s32.totalorder %s11, 1
    %p118 = por %p116, %p117
    %p119 = scmp.ne.s32.totalorder %s111, %s114
    %p120 = scmp.eq.s32.totalorder %s11, 0
    %p121 = por %p119, %p120
    %p122 = scmp.ne.s32.totalorder %s111, %s114
    %p123 = scmp.eq.s32.totalorder %s16, 1
    %p124 = por %p122, %p123
    %p125 = scmp.ne.s32.totalorder %s114, %s115
    %p126 = scmp.eq.s32.totalorder %s16, 0
    %p127 = por %p125, %p126
    %p128 = scmp.ne.s32.totalorder %s114, %s115
    %p129 = scmp.eq.s32.totalorder %s17, 1
    %p130 = por %p128, %p129
    %p132 = scmp.ne.s32.totalorder %s115, %s131
    %p133 = scmp.eq.s32.totalorder %s17, 0
    %p134 = por %p132, %p133
    %s136 = sadd.s32 %s135, 1
    %p139 = scmp.eq.s32.totalorder %s11, 1
    %p140 = scmp.ne.s32.totalorder %s135, %s137
    %p141 = scmp.eq.s32.totalorder %s11, 0
    %p142 = por %p140, %p141
    %p143 = scmp.ne.s32.totalorder %s135, %s137
    %p144 = scmp.eq.s32.totalorder %s16, 1
    %p145 = por %p143, %p144
    %p146 = scmp.ne.s32.totalorder %s137, %s138
    %p147 = scmp.eq.s32.totalorder %s16, 0
    %p148 = por %p146, %p147
    %p149 = scmp.ne.s32.totalorder %s137, %s138
    %p150 = scmp.eq.s32.totalorder %s17, 1
    %p151 = por %p149, %p150
    %p153 = scmp.ne.s32.totalorder %s138, %s152
    %p154 = scmp.eq.s32.totalorder %s17, 0
    %p155 = por %p153, %p154
    %s156 = ssub.s32 %s18, %s30
    %p157 = scmp.eq.s32.totalorder %s156, 0
    %s159 = sadd.s32 %s158, 1
    %s160 = scalar_select %p157, %s158, %s159
    %p163 = pneg %p157
    %p164 = scmp.eq.s32.totalorder %s11, 1
    %p165 = por %p163, %p164
    %p166 = scmp.ne.s32.totalorder %s158, %s161
    %p167 = scmp.eq.s32.totalorder %s11, 0
    %p168 = por %p166, %p167
    %p169 = scmp.ne.s32.totalorder %s158, %s161
    %p170 = scmp.eq.s32.totalorder %s16, 1
    %p171 = por %p169, %p170
    %p172 = scmp.ne.s32.totalorder %s161, %s162
    %p173 = scmp.eq.s32.totalorder %s16, 0
    %p174 = por %p172, %p173
    %p175 = scmp.ne.s32.totalorder %s161, %s162
    %p176 = scmp.eq.s32.totalorder %s17, 1
    %p177 = por %p175, %p176
    %p179 = scmp.ne.s32.totalorder %s162, %s178
    %p180 = scmp.eq.s32.totalorder %s17, 0
    %p181 = por %p179, %p180
    %p182 = scmp.le.s32.totalorder 1, %s11
    %p183 = scmp.lt.s32.totalorder %s11, 3
    %p184 = pnand %p182, %p183
    %p185 = pneg %p184
    // Predicated region
    $region9: #{mlp_pallas.1} parent=5 // pred_check
      _
    $region10: #{mlp_pallas.1} parent=5 // pred_check_branch
      %187 = sbr.rel (%p184) target = $region12
    $region11: #{mlp_pallas.1} parent=5 // pred_region
      %s188 = ssub.s32 %s11, 1
      // Predicated region
      $region13: #{mlp_pallas.1} parent=11 // pred_check
        %p189 = pneg %p75
      $region14: #{mlp_pallas.1} parent=11 // pred_check_branch
        %191 = sbr.rel (%p189) target = $region16
      $region15: #{mlp_pallas.1} parent=11 // pred_region
        %p192 = scmp.lt.s32.totalorder %s21, 0
        %s193 = scalar_select %p192, %s21, 0
        %s194 = smul.addr %s193, 8
        %s195 = scalar_lea.vmem %s1, %s194
      $region16: #{mlp_pallas.1} parent=11 // pred_fallthru
        _
      // Predicated region
      $region17: #{mlp_pallas.1} parent=11 // pred_check
        %p196 = pneg %p101
      $region18: #{mlp_pallas.1} parent=11 // pred_check_branch
        %198 = sbr.rel (%p196) target = $region20
      $region19: #{mlp_pallas.1} parent=11 // pred_region
        %p199 = scmp.lt.s32.totalorder %s21, 0
        %s200 = scalar_select %p199, %s21, 0
        %s201 = scalar_lea.vmem %s2, %s200
      $region20: #{mlp_pallas.1} parent=11 // pred_fallthru
        _
      // Predicated region
      $region21: #{mlp_pallas.1} parent=11 // pred_check
        %p202 = pneg %p127
      $region22: #{mlp_pallas.1} parent=11 // pred_check_branch
        %204 = sbr.rel (%p202) target = $region24
      $region23: #{mlp_pallas.1} parent=11 // pred_region
        %s205 = smul.u32 16, %s21
        %p206 = scmp.lt.s32.totalorder %s205, 15
        %s207 = scalar_select %p206, %s205, 15
        %s208 = smul.addr %s207, 8
        %s209 = scalar_lea.vmem %s3, %s208
        %s210 = smul.u32 16, %s21
      $region24: #{mlp_pallas.1} parent=11 // pred_fallthru
        _
      // Predicated region
      $region25: #{mlp_pallas.1} parent=11 // pred_check
        %p211 = pneg %p148
      $region26: #{mlp_pallas.1} parent=11 // pred_check_branch
        %213 = sbr.rel (%p211) target = $region28
      $region27: #{mlp_pallas.1} parent=11 // pred_region
        _
      $region28: #{mlp_pallas.1} parent=11 // pred_fallthru
        _
    $region12: #{mlp_pallas.1} parent=5 // pred_fallthru
      _
    %p214 = scmp.lt.s32.totalorder %s11, 2
    // Predicated region
    $region29: #{mlp_pallas.1} parent=5 // pred_check
      %p215 = pneg %p214
    $region30: #{mlp_pallas.1} parent=5 // pred_check_branch
      %217 = sbr.rel (%p215) target = $region32
    $region31: #{mlp_pallas.1} parent=5 // pred_region
      // Predicated region
      $region33: #{mlp_pallas.1} parent=31 // pred_check
        %p218 = pneg %p43
      $region34: #{mlp_pallas.1} parent=31 // pred_check_branch
        %220 = sbr.rel (%p218) target = $region36
      $region35: #{mlp_pallas.1} parent=31 // pred_region
        %p221 = scmp.lt.s32.totalorder %s18, 1
        %s222 = scalar_select %p221, %s18, 1
        %s223 = smul.addr %s222, 8
        %s224 = scalar_lea.vmem %s0, %s223
      $region36: #{mlp_pallas.1} parent=31 // pred_fallthru
        _
    $region32: #{mlp_pallas.1} parent=5 // pred_fallthru
      _
    %p225 = scmp.le.s32.totalorder 1, %s11
    %p226 = scmp.lt.s32.totalorder %s11, 3
    %p227 = pnand %p225, %p226
    %p228 = pneg %p227
    // Predicated region
    $region37: #{mlp_pallas.1} parent=5 // pred_check
      _
    $region38: #{mlp_pallas.1} parent=5 // pred_check_branch
      %230 = sbr.rel (%p227) target = $region40
    $region39: #{mlp_pallas.1} parent=5 // pred_region
      %s231 = ssub.s32 %s11, 1
      %p232 = scmp.lt.s32.totalorder %s20, 1
      %s233 = scalar_select %p232, %s20, 1
      %s234 = smul.addr %s233, 8
      %s235 = scalar_lea.vmem %s0, %s234
      %p236 = pneg %p49
      %p237 = pneg %p46
      %p238 = scmp.lt.s32.totalorder %s21, 0
      %s239 = scalar_select %p238, %s21, 0
      %s240 = smul.addr %s239, 8
      %s241 = scalar_lea.vmem %s1, %s240
      %p242 = pneg %p75
      %p243 = pneg %p72
      %p244 = scmp.lt.s32.totalorder %s21, 0
      %s245 = scalar_select %p244, %s21, 0
      %s246 = scalar_lea.vmem %s2, %s245
      %p247 = pneg %p101
      %p248 = pneg %p98
      %s249 = smul.u32 16, %s21
      %p250 = scmp.lt.s32.totalorder %s249, 15
      %s251 = scalar_select %p250, %s249, 15
      %s252 = smul.addr %s251, 8
      %s253 = scalar_lea.vmem %s3, %s252
      %p254 = pneg %p127
      %p255 = pneg %p124
      %p256 = pneg %p148
      %p257 = pneg %p145
      %p258 = pneg %p174
      %p259 = pneg %p171
      %p260 = scmp.lt.s32.totalorder %s20, 1
      %s261 = scalar_select %p260, %s20, 1
      %s262 = smul.addr %s261, 8
      %s263 = scalar_lea.vmem %s5, %s262
      %p264 = scmp.lt.s32.totalorder %s20, 1
      %s265 = scalar_select %p264, %s20, 1
      %s266 = smul.addr %s265, 8
      %s267 = scalar_lea.vmem %s0, %s266
      %p268 = scmp.lt.s32.totalorder %s21, 0
      %s269 = scalar_select %p268, %s21, 0
      %s270 = smul.addr %s269, 8
      %s271 = scalar_lea.vmem %s1, %s270
      %p272 = scmp.lt.s32.totalorder %s21, 0
      %s273 = scalar_select %p272, %s21, 0
      %s274 = scalar_lea.vmem %s2, %s273
      %s275 = smul.u32 16, %s21
      %p276 = scmp.lt.s32.totalorder %s275, 15
      %s277 = scalar_select %p276, %s275, 15
      %s278 = smul.addr %s277, 8
      %s279 = scalar_lea.vmem %s3, %s278
      %s280 = smul.u32 16, %s21
      %p281 = scmp.lt.s32.totalorder %s20, 1
      %s282 = scalar_select %p281, %s20, 1
      %s283 = smul.addr %s282, 8
      %s284 = scalar_lea.vmem %s5, %s283
      %v285 = vld [vmem:[%s267] sm:$0xff]
      %v286 = vld [vmem:[%s271] sm:$0xff]
      %v287 = vld [vmem:[%s271 + $0x8] sm:$0xff]
      %v288 = vld [vmem:[%s271 + $0x10] sm:$0xff]
      %v289 = vld [vmem:[%s271 + $0x18] sm:$0xff]
      %v290 = vld [vmem:[%s271 + $0x20] sm:$0xff]
      %v291 = vld [vmem:[%s271 + $0x28] sm:$0xff]
      %v292 = vld [vmem:[%s271 + $0x30] sm:$0xff]
      %v293 = vld [vmem:[%s271 + $0x38] sm:$0xff]
      %v294 = vld [vmem:[%s271 + $0x40] sm:$0xff]
      %v295 = vld [vmem:[%s271 + $0x48] sm:$0xff]
      %v296 = vld [vmem:[%s271 + $0x50] sm:$0xff]
      %v297 = vld [vmem:[%s271 + $0x58] sm:$0xff]
      %v298 = vld [vmem:[%s271 + $0x60] sm:$0xff]
      %v299 = vld [vmem:[%s271 + $0x68] sm:$0xff]
      %v300 = vld [vmem:[%s271 + $0x70] sm:$0xff]
      %v301 = vld [vmem:[%s271 + $0x78] sm:$0xff]
      %v302 = vld [vmem:[%s274] sm:$0x1]
      %v304 = vlaneseq
      %v305 = vshrl.u32 %v304, 7
      %v306 = vsub.s32 0, %v305
      %v307 = vrot.slane %v302, %v306
      %309 = vmatprep.subr.mxu0 0.0
      %310 = vmatpush1.msra.mxu0 %v301
      %311 = vmatprep.subr.mxu0 0.0
      %312 = vmatpush1.msra.mxu0 %v300
      %313 = vmatprep.subr.mxu0 0.0
      %314 = vmatpush1.msra.mxu0 %v299
      %315 = vmatprep.subr.mxu0 0.0
      %316 = vmatpush1.msra.mxu0 %v298
      %317 = vmatprep.subr.mxu0 0.0
      %318 = vmatpush1.msra.mxu0 %v297
      %319 = vmatprep.subr.mxu0 0.0
      %320 = vmatpush1.msra.mxu0 %v296
      %321 = vmatprep.subr.mxu0 0.0
      %322 = vmatpush1.msra.mxu0 %v295
      %323 = vmatprep.subr.mxu0 0.0
      %324 = vmatpush1.msra.mxu0 %v294
      %325 = vmatprep.subr.mxu0 0.0
      %326 = vmatpush1.msra.mxu0 %v293
      %327 = vmatprep.subr.mxu0 0.0
      %328 = vmatpush1.msra.mxu0 %v292
      %329 = vmatprep.subr.mxu0 0.0
      %330 = vmatpush1.msra.mxu0 %v291
      %331 = vmatprep.subr.mxu0 0.0
      %332 = vmatpush1.msra.mxu0 %v290
      %333 = vmatprep.subr.mxu0 0.0
      %334 = vmatpush1.msra.mxu0 %v289
      %335 = vmatprep.subr.mxu0 0.0
      %336 = vmatpush1.msra.mxu0 %v288
      %337 = vmatprep.subr.mxu0 0.0
      %338 = vmatpush1.msra.mxu0 %v287
      %339 = vmatprep.subr.mxu0 0.0
      %340 = vmatpush1.msra.mxu0 %v286
      %341 = vmatprep.subr.mxu0 0.0
      %342 = vmatpush2.msra.mxu0 0.0
      %343 = vmatprep.subr.mxu0 0.0
      %344 = vmatpush2.msra.mxu0 0.0
      %345 = vmatprep.subr.mxu0 0.0
      %346 = vmatpush2.msra.mxu0 0.0
      %347 = vmatprep.subr.mxu0 0.0
      %348 = vmatpush2.msra.mxu0 0.0
      %349 = vmatprep.subr.mxu0 0.0
      %350 = vmatpush2.msra.mxu0 0.0
      %351 = vmatprep.subr.mxu0 0.0
      %352 = vmatpush2.msra.mxu0 0.0
      %353 = vmatprep.subr.mxu0 0.0
      %354 = vmatpush2.msra.mxu0 0.0
      %355 = vmatprep.subr.mxu0 0.0
      %356 = vmatpush2.msra.mxu0 0.0
      %357 = vmatprep.subr.mxu0 0.0
      %358 = vmatpush2.msra.mxu0 0.0
      %359 = vmatprep.subr.mxu0 0.0
      %360 = vmatpush2.msra.mxu0 0.0
      %361 = vmatprep.subr.mxu0 0.0
      %362 = vmatpush2.msra.mxu0 0.0
      %363 = vmatprep.subr.mxu0 0.0
      %364 = vmatpush2.msra.mxu0 0.0
      %365 = vmatprep.subr.mxu0 0.0
      %366 = vmatpush2.msra.mxu0 0.0
      %367 = vmatprep.subr.mxu0 0.0
      %368 = vmatpush2.msra.mxu0 0.0
      %369 = vmatprep.subr.mxu0 0.0
      %370 = vmatpush2.msra.mxu0 0.0
      %371 = vmatprep.subr.mxu0 0.0
      %372 = vmatpush2.msra.mxu0 0.0
      %373 = vmatprep.mubr.f32.mxu0 0.0
      %374 = vmatmul.mubr.f32.gmra.mxu0 %v285
      %v375 = vpop.f32.mrf.mxu0
      %v376 = vadd.f32 %v307, %v375
      %v377 = vpop.f32.mrf.mxu0
      %378 = vdwg.mxu0
      %v379 = vmul.f32 %v376, 0.5
      %v380 = vmul.f32 %v376, 0.70710677
      %v381 = verf.f32.pop %v380
      %v382 = vadd.f32 %v381, 1.0
      %v383 = vmul.f32 %v379, %v382
      %v384 = vld [vmem:[%s279] sm:$0xff]
      %v385 = vld [vmem:[%s279 + $0x8] sm:$0xff]
      %v386 = vld [vmem:[%s279 + $0x10] sm:$0xff]
      %v387 = vld [vmem:[%s279 + $0x18] sm:$0xff]
      %v388 = vld [vmem:[%s279 + $0x20] sm:$0xff]
      %v389 = vld [vmem:[%s279 + $0x28] sm:$0xff]
      %v390 = vld [vmem:[%s279 + $0x30] sm:$0xff]
      %v391 = vld [vmem:[%s279 + $0x38] sm:$0xff]
      %v392 = vld [vmem:[%s279 + $0x40] sm:$0xff]
      %v393 = vld [vmem:[%s279 + $0x48] sm:$0xff]
      %v394 = vld [vmem:[%s279 + $0x50] sm:$0xff]
      %v395 = vld [vmem:[%s279 + $0x58] sm:$0xff]
      %v396 = vld [vmem:[%s279 + $0x60] sm:$0xff]
      %v397 = vld [vmem:[%s279 + $0x68] sm:$0xff]
      %v398 = vld [vmem:[%s279 + $0x70] sm:$0xff]
      %v399 = vld [vmem:[%s279 + $0x78] sm:$0xff]
      %400 = vmatprep.subr.mxu0 0.0
      %401 = vmatpush1.msra.mxu0 %v399
      %402 = vmatprep.subr.mxu0 0.0
      %403 = vmatpush1.msra.mxu0 %v398
      %404 = vmatprep.subr.mxu0 0.0
      %405 = vmatpush1.msra.mxu0 %v397
      %406 = vmatprep.subr.mxu0 0.0
      %407 = vmatpush1.msra.mxu0 %v396
      %408 = vmatprep.subr.mxu0 0.0
      %409 = vmatpush1.msra.mxu0 %v395
      %410 = vmatprep.subr.mxu0 0.0
      %411 = vmatpush1.msra.mxu0 %v394
      %412 = vmatprep.subr.mxu0 0.0
      %413 = vmatpush1.msra.mxu0 %v393
      %414 = vmatprep.subr.mxu0 0.0
      %415 = vmatpush1.msra.mxu0 %v392
      %416 = vmatprep.subr.mxu0 0.0
      %417 = vmatpush1.msra.mxu0 %v391
      %418 = vmatprep.subr.mxu0 0.0
      %419 = vmatpush1.msra.mxu0 %v390
      %420 = vmatprep.subr.mxu0 0.0
      %421 = vmatpush1.msra.mxu0 %v389
      %422 = vmatprep.subr.mxu0 0.0
      %423 = vmatpush1.msra.mxu0 %v388
      %424 = vmatprep.subr.mxu0 0.0
      %425 = vmatpush1.msra.mxu0 %v387
      %426 = vmatprep.subr.mxu0 0.0
      %427 = vmatpush1.msra.mxu0 %v386
      %428 = vmatprep.subr.mxu0 0.0
      %429 = vmatpush1.msra.mxu0 %v385
      %430 = vmatprep.subr.mxu0 0.0
      %431 = vmatpush1.msra.mxu0 %v384
      %432 = vmatprep.subr.mxu0 0.0
      %433 = vmatpush2.msra.mxu0 0.0
      %434 = vmatprep.subr.mxu0 0.0
      %435 = vmatpush2.msra.mxu0 0.0
      %436 = vmatprep.subr.mxu0 0.0
      %437 = vmatpush2.msra.mxu0 0.0
      %438 = vmatprep.subr.mxu0 0.0
      %439 = vmatpush2.msra.mxu0 0.0
      %440 = vmatprep.subr.mxu0 0.0
      %441 = vmatpush2.msra.mxu0 0.0
      %442 = vmatprep.subr.mxu0 0.0
      %443 = vmatpush2.msra.mxu0 0.0
      %444 = vmatprep.subr.mxu0 0.0
      %445 = vmatpush2.msra.mxu0 0.0
      %446 = vmatprep.subr.mxu0 0.0
      %447 = vmatpush2.msra.mxu0 0.0
      %448 = vmatprep.subr.mxu0 0.0
      %449 = vmatpush2.msra.mxu0 0.0
      %450 = vmatprep.subr.mxu0 0.0
      %451 = vmatpush2.msra.mxu0 0.0
      %452 = vmatprep.subr.mxu0 0.0
      %453 = vmatpush2.msra.mxu0 0.0
      %454 = vmatprep.subr.mxu0 0.0
      %455 = vmatpush2.msra.mxu0 0.0
      %456 = vmatprep.subr.mxu0 0.0
      %457 = vmatpush2.msra.mxu0 0.0
      %458 = vmatprep.subr.mxu0 0.0
      %459 = vmatpush2.msra.mxu0 0.0
      %460 = vmatprep.subr.mxu0 0.0
      %461 = vmatpush2.msra.mxu0 0.0
      %462 = vmatprep.subr.mxu0 0.0
      %463 = vmatpush2.msra.mxu0 0.0
      %464 = vmatprep.mubr.f32.mxu0 0.0
      %465 = vmatmul.mubr.f32.gmra.mxu0 %v383
      %v466 = vpop.f32.mrf.mxu0
      %v467 = vadd.f32 0.0, %v466
      %v468 = vpop.f32.mrf.mxu0
      %469 = vdwg.mxu0
      %p470 = scmp.eq.s32.totalorder %s21, 0
      // Predicated region
      $region41: #{mlp_pallas.1} parent=39 // pred_check
        %p471 = pneg %p470
      $region42: #{mlp_pallas.1} parent=39 // pred_check_branch
        %473 = sbr.rel (%p471) target = $region44
      $region43: #{mlp_pallas.1} parent=39 // pred_region
        %v474 = vld [vmem:[%s4] sm:$0x1]
        %v476 = vlaneseq
        %v477 = vshrl.u32 %v476, 7
        %v478 = vsub.s32 0, %v477
        %v479 = vrot.slane %v474, %v478
        %v481 = vadd.f32 %v467, %v479
        %482 = vst [vmem:[%s284] sm:$0xff] %v481
      $region44: #{mlp_pallas.1} parent=39 // pred_fallthru
        _
      %p483 = scmp.ne.s32.totalorder %s21, 0
      // Predicated region
      $region45: #{mlp_pallas.1} parent=39 // pred_check
        %p484 = pneg %p483
      $region46: #{mlp_pallas.1} parent=39 // pred_check_branch
        %486 = sbr.rel (%p484) target = $region48
      $region47: #{mlp_pallas.1} parent=39 // pred_region
        %v487 = vld [vmem:[%s284] sm:$0xff]
        %v488 = vadd.f32 %v487, %v467
        %489 = vst [vmem:[%s284] sm:$0xff] %v488
      $region48: #{mlp_pallas.1} parent=39 // pred_fallthru
        _
      %p490 = scmp.lt.s32.totalorder %s20, 1
      %s491 = scalar_select %p490, %s20, 1
      %s492 = smul.addr %s491, 8
      %s493 = scalar_lea.vmem %s5, %s492
      // Predicated region
      $region49: #{mlp_pallas.1} parent=39 // pred_check
        %p494 = pneg %p171
      $region50: #{mlp_pallas.1} parent=39 // pred_check_branch
        %496 = sbr.rel (%p494) target = $region52
      $region51: #{mlp_pallas.1} parent=39 // pred_region
        _
      $region52: #{mlp_pallas.1} parent=39 // pred_fallthru
        _
    $region40: #{mlp_pallas.1} parent=5 // pred_fallthru
      _
    %p497 = scmp.le.s32.totalorder 2, %s11
    // Predicated region
    $region53: #{mlp_pallas.1} parent=5 // pred_check
      %p498 = pneg %p497
    $region54: #{mlp_pallas.1} parent=5 // pred_check_branch
      %500 = sbr.rel (%p498) target = $region56
    $region55: #{mlp_pallas.1} parent=5 // pred_region
      %s501 = ssub.s32 %s11, 2
      // Predicated region
      $region57: #{mlp_pallas.1} parent=55 // pred_check
        %p502 = pneg %p177
      $region58: #{mlp_pallas.1} parent=55 // pred_check_branch
        %504 = sbr.rel (%p502) target = $region60
      $region59: #{mlp_pallas.1} parent=55 // pred_region
        %p505 = scmp.lt.s32.totalorder %s22, 1
        %s506 = scalar_select %p505, %s22, 1
        %s507 = smul.addr %s506, 8
        %s508 = scalar_lea.vmem %s5, %s507
      $region60: #{mlp_pallas.1} parent=55 // pred_fallthru
        _
    $region56: #{mlp_pallas.1} parent=5 // pred_fallthru
      _
  $region6: #{mlp_pallas.1} parent=0 // loop_footer
    %s15 = sadd.s32 1, %s11
  $region7: #{mlp_pallas.1} parent=0 // loop_footer_branch
    %10 = sbr.rel target = $region3
  $region8: #{mlp_pallas.1} parent=0 // loop_exit
    _

</llo_original>
